<compile_context>
chip_gen: v5e
topology: v5e:2x2
jax: 0.10.0
libtpu: 0.0.40
codegen_flags: <defaults>
</compile_context>

<pallas_src>
import jax
import jax.numpy as jnp
from jax.experimental import pallas as pl
from jax.experimental.pallas import tpu as pltpu


def _se_kernel(x_ref, w1_ref, w2_ref, o_ref):
    # x_ref/o_ref: (Bt, C, HW_pad); w1_ref: (C, C/r) (pre-scaled by 1/HW);
    # w2_ref: (C/r, C). Weights are VMEM-resident across grid steps.
    # Squeeze: spatial sum in f32 (1/HW already folded into w1).
    pooled = jnp.sum(x_ref[...].astype(jnp.float32), axis=-1)          # (Bt, C)
    # FC gate, f32 accumulation on the MXU.
    h = jnp.maximum(
        jnp.dot(pooled, w1_ref[...], preferred_element_type=jnp.float32), 0.0)
    y = jax.nn.sigmoid(
        jnp.dot(h, w2_ref[...], preferred_element_type=jnp.float32))   # (Bt, C)
    # Excite: re-read the tile from VMEM (vld is cheap; the kernel is HBM-bound)
    # rather than keeping the whole (Bt, C, HW) tile live in vregs.
    o_ref[...] = (x_ref[...].astype(jnp.float32)
                  * y[:, :, None]).astype(o_ref.dtype)


def se_block(x_nchw, w1_t, w2_t):
    """x_nchw: (B, C, H, W) f32/bf16; w1_t = W1^T: (C, C//r); w2_t = W2^T: (C//r, C)."""
    B, C, H, W = x_nchw.shape
    HW = H * W
    Cr = w1_t.shape[1]
    dtype = x_nchw.dtype
    itemsize = jnp.dtype(dtype).itemsize

    # --- Lane-dense spatial axis: pad HW up to a multiple of 128. ---
    HW_pad = max(128, pl.cdiv(HW, 128) * 128)
    x = x_nchw.reshape(B, C, HW)
    if HW_pad != HW:
        x = jnp.pad(x, ((0, 0), (0, 0), (0, HW_pad - HW)))

    # --- Batch tiling: ~2 MiB blocks, VMEM-safe on v7x, >=2 grid steps. ---
    per_batch = C * HW_pad * itemsize
    target_block = 2 * 1024 * 1024
    Bt = max(1, min(B, target_block // max(per_batch, 1)))
    while Bt > 1 and 4 * Bt * per_batch > 40 * 1024 * 1024:   # in+out double buffers
        Bt -= 1
    if B >= 2:
        Bt = min(Bt, max(1, B // 2))      # keep grid >= 2 for megacore / pipelining
    nb = pl.cdiv(B, Bt)

    # Pad batch to a multiple of Bt (padded rows yield zeros; sliced off below).
    B_pad = nb * Bt
    if B_pad != B:
        x = jnp.pad(x, ((0, B_pad - B), (0, 0), (0, 0)))

    # Fold the 1/HW pooling scale into the first FC weight (kernel sums).
    w1s = w1_t.astype(jnp.float32) / float(HW)
    w2f = w2_t.astype(jnp.float32)

    block_bytes = Bt * per_batch
    vmem_limit = int(min(48 * 1024 * 1024,
                         max(32 * 1024 * 1024, 5 * block_bytes)))

    cost = pl.CostEstimate(
        flops=2 * B * C * HW + 4 * B * C * Cr,     # pool + gate mul + 2 tiny GEMMs
        transcendentals=B * C,                      # sigmoid
        bytes_accessed=2 * B * C * HW * itemsize + 2 * C * Cr * 4,
    )

    out = pl.pallas_call(
        _se_kernel,
        out_shape=jax.ShapeDtypeStruct((B_pad, C, HW_pad), dtype),
        grid_spec=pltpu.PrefetchScalarGridSpec(
            num_scalar_prefetch=0,
            grid=(nb,),
            in_specs=[
                pl.BlockSpec((Bt, C, HW_pad), lambda b: (b, 0, 0)),
                pl.BlockSpec((C, Cr), lambda b: (0, 0)),   # VMEM-resident weights
                pl.BlockSpec((Cr, C), lambda b: (0, 0)),
            ],
            out_specs=pl.BlockSpec((Bt, C, HW_pad), lambda b: (b, 0, 0)),
        ),
        compiler_params=pltpu.CompilerParams(
            dimension_semantics=("parallel",),
            vmem_limit_bytes=vmem_limit,
        ),
        cost_estimate=cost,
    )(x, w1s, w2f)

    return out[:B, :, :HW].reshape(B, C, H, W)


def se_block_ref(x_nchw, w1_t, w2_t):
    """Pure-JAX reference mirroring the PyTorch forward (f32 math)."""
    pooled = jnp.mean(x_nchw.astype(jnp.float32), axis=(2, 3))       # (B, C)
    h = jnp.maximum(pooled @ w1_t.astype(jnp.float32), 0.0)          # (B, C//r)
    y = jax.nn.sigmoid(h @ w2_t.astype(jnp.float32))                 # (B, C)
    return x_nchw.astype(jnp.float32) * y[:, :, None, None]


if __name__ == "__main__":
    key = jax.random.PRNGKey(0)
    k1, k2, k3, k4, k5, k6 = jax.random.split(key, 6)

    # --- Case 1: f32, lane-aligned spatial (C=128, reduction=16 -> C/r=8). ---
    B, C, H, W, r = 2, 128, 16, 16, 16
    Cr = C // r
    x = jax.random.normal(k1, (B, C, H, W), dtype=jnp.float32)
    w1_t = jax.random.normal(k2, (C, Cr), dtype=jnp.float32) / jnp.sqrt(C)
    w2_t = jax.random.normal(k3, (Cr, C), dtype=jnp.float32) / jnp.sqrt(Cr)

    out = jax.block_until_ready(se_block(x, w1_t, w2_t))
    ref = se_block_ref(x, w1_t, w2_t)
    assert out.shape == (B, C, H, W)
    assert jnp.allclose(out, ref, atol=1e-5, rtol=1e-5), "f32 mismatch vs reference"

    # --- Case 2: bf16 I/O with non-lane-aligned spatial (HW=49 -> padded to 128). ---
    B2, C2, H2, W2, r2 = 4, 64, 7, 7, 8
    Cr2 = C2 // r2
    x2 = jax.random.normal(k4, (B2, C2, H2, W2), dtype=jnp.float32).astype(jnp.bfloat16)
    w1b = jax.random.normal(k5, (C2, Cr2), dtype=jnp.float32) / jnp.sqrt(C2)
    w2b = jax.random.normal(k6, (Cr2, C2), dtype=jnp.float32) / jnp.sqrt(Cr2)

    out2 = jax.block_until_ready(se_block(x2, w1b, w2b))
    ref2 = se_block_ref(x2, w1b, w2b)
    assert out2.shape == (B2, C2, H2, W2)
    assert out2.dtype == jnp.bfloat16
    assert jnp.allclose(out2.astype(jnp.float32), ref2, atol=5e-2, rtol=5e-2), \
        "bf16 mismatch vs reference"

    print("KERNEL_OK")
</pallas_src>

<mosaic_0001>
module attributes {stable_mosaic.version = 11 : i64} {
  func.func @_se_kernel(%arg0: i32, %arg1: memref<1x128x256xf32, #tpu.memory_space<vmem>>, %arg2: memref<128x8xf32, #tpu.memory_space<vmem>>, %arg3: memref<8x128xf32, #tpu.memory_space<vmem>>, %arg4: memref<1x128x256xf32, #tpu.memory_space<vmem>>) attributes {dimension_semantics = [#tpu.dimension_semantics<parallel>], iteration_bounds = array<i64: 2>, scalar_prefetch = 0 : i64, scratch_operands = 0 : i64, tpu.core_type = #tpu.core_type<tc>, window_params = [{transform_indices = @transform_0, window_bounds = array<i64: 1, 128, 256>}, {pipeline_mode = #tpu.pipeline_mode<synchronous>, transform_indices = @transform_1, window_bounds = array<i64: 128, 8>}, {pipeline_mode = #tpu.pipeline_mode<synchronous>, transform_indices = @transform_2, window_bounds = array<i64: 8, 128>}, {transform_indices = @transform_3, window_bounds = array<i64: 1, 128, 256>}]} {
    %c0 = arith.constant 0 : index
    %c0_0 = arith.constant 0 : index
    %c0_1 = arith.constant 0 : index
    %0 = vector.load %arg1[%c0, %c0_0, %c0_1] : memref<1x128x256xf32, #tpu.memory_space<vmem>>, vector<1x128x256xf32>
    %cst = arith.constant dense<0.000000e+00> : vector<1x128xf32>
    %1 = vector.multi_reduction <add>, %0, %cst [2] : vector<1x128x256xf32> to vector<1x128xf32>
    %c0_2 = arith.constant 0 : index
    %c0_3 = arith.constant 0 : index
    %2 = vector.load %arg2[%c0_2, %c0_3] : memref<128x8xf32, #tpu.memory_space<vmem>>, vector<128x8xf32>
    %cst_4 = arith.constant dense<0.000000e+00> : vector<1x8xf32>
    %3 = tpu.matmul %1, %2, %cst_4 {dimension_numbers = #tpu.dot_dimension_numbers<[1], [0], [0], [1], [0, 0, 1, 1], [], []>} : vector<1x128xf32>, vector<128x8xf32>, vector<1x8xf32> -> vector<1x8xf32>
    %cst_5 = arith.constant 0.000000e+00 : f32
    %4 = vector.broadcast %cst_5 : f32 to vector<1x8xf32>
    %5 = arith.maximumf %3, %4 : vector<1x8xf32>
    %c0_6 = arith.constant 0 : index
    %c0_7 = arith.constant 0 : index
    %6 = vector.load %arg3[%c0_6, %c0_7] : memref<8x128xf32, #tpu.memory_space<vmem>>, vector<8x128xf32>
    %cst_8 = arith.constant dense<0.000000e+00> : vector<1x128xf32>
    %7 = tpu.matmul %5, %6, %cst_8 {dimension_numbers = #tpu.dot_dimension_numbers<[1], [0], [0], [1], [0, 0, 1, 1], [], []>} : vector<1x8xf32>, vector<8x128xf32>, vector<1x128xf32> -> vector<1x128xf32>
    %8 = arith.negf %7 : vector<1x128xf32>
    %9 = math.exp %8 : vector<1x128xf32>
    %cst_9 = arith.constant 1.000000e+00 : f32
    %10 = vector.broadcast %cst_9 : f32 to vector<1x128xf32>
    %11 = arith.addf %10, %9 : vector<1x128xf32>
    %12 = arith.divf %10, %11 : vector<1x128xf32>
    %c0_10 = arith.constant 0 : index
    %c0_11 = arith.constant 0 : index
    %c0_12 = arith.constant 0 : index
    %13 = vector.load %arg1[%c0_10, %c0_11, %c0_12] : memref<1x128x256xf32, #tpu.memory_space<vmem>>, vector<1x128x256xf32>
    %14 = vector.shape_cast %12 : vector<1x128xf32> to vector<1x128x1xf32>
    %15 = vector.broadcast %14 : vector<1x128x1xf32> to vector<1x128x256xf32>
    %16 = arith.mulf %13, %15 : vector<1x128x256xf32>
    %c0_13 = arith.constant 0 : index
    %c0_14 = arith.constant 0 : index
    %c0_15 = arith.constant 0 : index
    %17 = vector.load %arg4[%c0_13, %c0_14, %c0_15] : memref<1x128x256xf32, #tpu.memory_space<vmem>>, vector<1x128x256xf32>
    tpu.vector_store %arg4[%c0_13, %c0_14, %c0_15], %16 {strides = array<i32>} : memref<1x128x256xf32, #tpu.memory_space<vmem>>, vector<1x128x256xf32>,
    return
  }
  func.func @transform_0(%arg0: i32) -> (i32, i32, i32) {
    %c0_i32 = arith.constant 0 : i32
    %c0_i32_0 = arith.constant 0 : i32
    %c0_i32_1 = arith.constant 0 : i32
    return %arg0, %c0_i32, %c0_i32_0 : i32, i32, i32
  }
  func.func @transform_1(%arg0: i32) -> (i32, i32) {
    %c0_i32 = arith.constant 0 : i32
    %c0_i32_0 = arith.constant 0 : i32
    %c0_i32_1 = arith.constant 0 : i32
    return %c0_i32, %c0_i32_0 : i32, i32
  }
  func.func @transform_2(%arg0: i32) -> (i32, i32) {
    %c0_i32 = arith.constant 0 : i32
    %c0_i32_0 = arith.constant 0 : i32
    %c0_i32_1 = arith.constant 0 : i32
    return %c0_i32, %c0_i32_0 : i32, i32
  }
  func.func @transform_3(%arg0: i32) -> (i32, i32, i32) {
    %c0_i32 = arith.constant 0 : i32
    %c0_i32_0 = arith.constant 0 : i32
    %c0_i32_1 = arith.constant 0 : i32
    return %arg0, %c0_i32, %c0_i32_0 : i32, i32, i32
  }
}

</mosaic_0001>

<llo_original>
// kernel: tpu_custom_call.1
$region0: #{tpu_custom_call.1}
  #allocation0 [shape = 'u32[]', space=smem, size = 0x4, offset = 0x4, fixed_abs, tag = 'smem constant byte address 0x4 - core index']
  #allocation1 [shape = 'u32[72,128]{1,0:T(1,128)}', space=vmem, size = 0x9000, scoped, tag = 'internal scratch']
  %s0 = inlined_call_operand.hbm [shape: f32[2,128,256], index: 0, kind: input, shape index: {}]
  %s1 = inlined_call_operand.vmem [shape: f32[128,8], index: 1, kind: input, shape index: {}]
  %s2 = inlined_call_operand.vmem [shape: f32[8,128], index: 2, kind: input, shape index: {}]
  %s3 = inlined_call_operand.hbm [shape: f32[2,128,256], index: 3, kind: output, shape index: {}]
  %s4 = sld [smem:[#allocation0]]
  $region49: #{tpu_custom_call.1} parent=0
    _
  %s6 = ssub.s32 1, %s4
  %s7 = scalar_select 0, %s6, %s4
  $region1: #{tpu_custom_call.1} parent=0
    #allocation2 [shape = 'u8[262144]{0}', space=vmem, size = 0x40000, scoped, tag = 'input window, operand 0']
    #allocation3 [shape = 's32[2]{0}', space=sflag, size = 0x8, scoped, tag = 'scoped memory for tpu_custom_call.1']
    #allocation4 [shape = 's32[2]{0}', space=sflag, size = 0x8, scoped, tag = 'scoped memory for tpu_custom_call.1']
    #allocation5 [shape = 'u8[262144]{0}', space=vmem, size = 0x40000, scoped, tag = 'output window, operand 0']
    %8 = vsyncpa [#allocation3], 0
    %s9 = scalar_lea.sflag [#allocation3], 1
    %10 = vsyncpa %s9, 0
    %11 = vsyncpa [#allocation4], 0
    %s12 = scalar_lea.sflag [#allocation4], 1
    %13 = vsyncpa %s12, 0
    loop: start=0, step=1, limit=4
    $region2: #{tpu_custom_call.1} parent=1 // loop_pre_header
      _
    $region3: #{tpu_custom_call.1} parent=1 // loop_header
      %s15 = sphi 0, %s19
      %p16 = scmp.ge.s32.totalorder %s15, 4
      %s25 = sphi 0, %s27
      %s28 = sphi 0, %s25
      %s29 = sphi 0, %s28
      %s45 = sphi 0, %s29
      %s49 = sphi 0, %s49
      %s51 = sphi 0, %s49
      %s52 = sphi 0, %s51
      %s66 = sphi 0, %s52
      %s70 = sphi 0, %s70
      %s72 = sphi 0, %s70
      %s73 = sphi 0, %s72
      %s87 = sphi 0, %s73
      %s93 = sphi 0, %s95
      %s96 = sphi 0, %s93
      %s97 = sphi 0, %s96
      %s113 = sphi 0, %s97
    $region4: #{tpu_custom_call.1} parent=1 // loop_header_branch
      %18 = sbr.rel (%p16) target = $region8
    $region5: #{tpu_custom_call.1} parent=1 // loop_body
      %s20 = ssub.s32 %s15, 1
      %s21 = ssub.s32 %s15, 2
      %s22 = sadd.s32 %s15, 1
      %s23 = ssub.s32 %s15, %s22
      %p24 = scmp.eq.s32.totalorder %s23, 0
      %s26 = sadd.s32 %s25, 1
      %s27 = scalar_select %p24, %s25, %s26
      %p30 = pneg %p24
      %p31 = scmp.eq.s32.totalorder %s15, 1
      %p32 = por %p30, %p31
      %p33 = scmp.ne.s32.totalorder %s25, %s28
      %p34 = scmp.eq.s32.totalorder %s15, 0
      %p35 = por %p33, %p34
      %p36 = scmp.ne.s32.totalorder %s25, %s28
      %p37 = scmp.eq.s32.totalorder %s20, 1
      %p38 = por %p36, %p37
      %p39 = scmp.ne.s32.totalorder %s28, %s29
      %p40 = scmp.eq.s32.totalorder %s20, 0
      %p41 = por %p39, %p40
      %p42 = scmp.ne.s32.totalorder %s28, %s29
      %p43 = scmp.eq.s32.totalorder %s21, 1
      %p44 = por %p42, %p43
      %p46 = scmp.ne.s32.totalorder %s29, %s45
      %p47 = scmp.eq.s32.totalorder %s21, 0
      %p48 = por %p46, %p47
      %s50 = sadd.s32 %s49, 1
      %p53 = scmp.eq.s32.totalorder %s15, 1
      %p54 = scmp.ne.s32.totalorder %s49, %s51
      %p55 = scmp.eq.s32.totalorder %s15, 0
      %p56 = por %p54, %p55
      %p57 = scmp.ne.s32.totalorder %s49, %s51
      %p58 = scmp.eq.s32.totalorder %s20, 1
      %p59 = por %p57, %p58
      %p60 = scmp.ne.s32.totalorder %s51, %s52
      %p61 = scmp.eq.s32.totalorder %s20, 0
      %p62 = por %p60, %p61
      %p63 = scmp.ne.s32.totalorder %s51, %s52
      %p64 = scmp.eq.s32.totalorder %s21, 1
      %p65 = por %p63, %p64
      %p67 = scmp.ne.s32.totalorder %s52, %s66
      %p68 = scmp.eq.s32.totalorder %s21, 0
      %p69 = por %p67, %p68
      %s71 = sadd.s32 %s70, 1
      %p74 = scmp.eq.s32.totalorder %s15, 1
      %p75 = scmp.ne.s32.totalorder %s70, %s72
      %p76 = scmp.eq.s32.totalorder %s15, 0
      %p77 = por %p75, %p76
      %p78 = scmp.ne.s32.totalorder %s70, %s72
      %p79 = scmp.eq.s32.totalorder %s20, 1
      %p80 = por %p78, %p79
      %p81 = scmp.ne.s32.totalorder %s72, %s73
      %p82 = scmp.eq.s32.totalorder %s20, 0
      %p83 = por %p81, %p82
      %p84 = scmp.ne.s32.totalorder %s72, %s73
      %p85 = scmp.eq.s32.totalorder %s21, 1
      %p86 = por %p84, %p85
      %p88 = scmp.ne.s32.totalorder %s73, %s87
      %p89 = scmp.eq.s32.totalorder %s21, 0
      %p90 = por %p88, %p89
      %s91 = ssub.s32 %s15, %s22
      %p92 = scmp.eq.s32.totalorder %s91, 0
      %s94 = sadd.s32 %s93, 1
      %s95 = scalar_select %p92, %s93, %s94
      %p98 = pneg %p92
      %p99 = scmp.eq.s32.totalorder %s15, 1
      %p100 = por %p98, %p99
      %p101 = scmp.ne.s32.totalorder %s93, %s96
      %p102 = scmp.eq.s32.totalorder %s15, 0
      %p103 = por %p101, %p102
      %p104 = scmp.ne.s32.totalorder %s93, %s96
      %p105 = scmp.eq.s32.totalorder %s20, 1
      %p106 = por %p104, %p105
      %p107 = scmp.ne.s32.totalorder %s96, %s97
      %p108 = scmp.eq.s32.totalorder %s20, 0
      %p109 = por %p107, %p108
      %p110 = scmp.ne.s32.totalorder %s96, %s97
      %p111 = scmp.eq.s32.totalorder %s21, 1
      %p112 = por %p110, %p111
      %p114 = scmp.ne.s32.totalorder %s97, %s113
      %p115 = scmp.eq.s32.totalorder %s21, 0
      %p116 = por %p114, %p115
      %p117 = scmp.le.s32.totalorder 1, %s15
      %p118 = scmp.lt.s32.totalorder %s15, 3
      %p119 = pnand %p117, %p118
      %p120 = pneg %p119
      // Predicated region
      $region9: #{tpu_custom_call.1} parent=5 // pred_check
        _
      $region10: #{tpu_custom_call.1} parent=5 // pred_check_branch
        %122 = sbr.rel (%p119) target = $region12
      $region11: #{tpu_custom_call.1} parent=5 // pred_region
        %s123 = ssub.s32 %s15, 1
        // Predicated region
        $region13: #{tpu_custom_call.1} parent=11 // pred_check
          %p124 = pneg %p62
        $region14: #{tpu_custom_call.1} parent=11 // pred_check_branch
          %126 = sbr.rel (%p124) target = $region16
        $region15: #{tpu_custom_call.1} parent=11 // pred_region
          _
        $region16: #{tpu_custom_call.1} parent=11 // pred_fallthru
          _
        // Predicated region
        $region17: #{tpu_custom_call.1} parent=11 // pred_check
          %p127 = pneg %p83
        $region18: #{tpu_custom_call.1} parent=11 // pred_check_branch
          %129 = sbr.rel (%p127) target = $region20
        $region19: #{tpu_custom_call.1} parent=11 // pred_region
          _
        $region20: #{tpu_custom_call.1} parent=11 // pred_fallthru
          _
      $region12: #{tpu_custom_call.1} parent=5 // pred_fallthru
        _
      %p130 = scmp.lt.s32.totalorder %s15, 2
      // Predicated region
      $region21: #{tpu_custom_call.1} parent=5 // pred_check
        %p131 = pneg %p130
      $region22: #{tpu_custom_call.1} parent=5 // pred_check_branch
        %133 = sbr.rel (%p131) target = $region24
      $region23: #{tpu_custom_call.1} parent=5 // pred_region
        // Predicated region
        $region25: #{tpu_custom_call.1} parent=23 // pred_check
          %p134 = pneg %p35
        $region26: #{tpu_custom_call.1} parent=23 // pred_check_branch
          %136 = sbr.rel (%p134) target = $region28
        $region27: #{tpu_custom_call.1} parent=23 // pred_region
          %s137 = sand.u32 %s25, 1
          %s138 = scalar_lea.sflag [#allocation3], %s137
          %s139 = sand.u32 %s25, 1
          %s140 = smul.addr %s139, 256
          %s141 = scalar_lea.vmem [#allocation2], %s140
          %143 = vsyncadd %s138, 0
          %s144 = smul.addr %s15, 32
          %s145 = smul.addr %s144, 8
          %s146 = scalar_lea.hbm %s0, %s145
          %s147 = sshll.u32 %s146, 4
          %s148 = int_to_ptr.hbm [resolvable:$true] %s147
          %s149 = sshll.u32 %s141, 4
          %s150 = int_to_ptr.vmem [resolvable:$true] %s149
          %155 = dma.hbm_to_vmem [thread:$0]  %s148, 4096, %s150, %s138, 256, 256, 16
        $region28: #{tpu_custom_call.1} parent=23 // pred_fallthru
          _
      $region24: #{tpu_custom_call.1} parent=5 // pred_fallthru
        _
      %p156 = scmp.le.s32.totalorder 1, %s15
      %p157 = scmp.lt.s32.totalorder %s15, 3
      %p158 = pnand %p156, %p157
      %p159 = pneg %p158
      // Predicated region
      $region29: #{tpu_custom_call.1} parent=5 // pred_check
        _
      $region30: #{tpu_custom_call.1} parent=5 // pred_check_branch
        %161 = sbr.rel (%p158) target = $region32
      $region31: #{tpu_custom_call.1} parent=5 // pred_region
        %s162 = ssub.s32 %s15, 1
        %s163 = sand.u32 %s28, 1
        %s164 = scalar_lea.sflag [#allocation3], %s163
        %s165 = sand.u32 %s28, 1
        %s166 = smul.addr %s165, 256
        %s167 = scalar_lea.vmem [#allocation2], %s166
        // Predicated region
        $region33: #{tpu_custom_call.1} parent=31 // pred_check
          %p168 = pneg %p41
        $region34: #{tpu_custom_call.1} parent=31 // pred_check_branch
          %170 = sbr.rel (%p168) target = $region36
        $region35: #{tpu_custom_call.1} parent=31 // pred_region
          %172 = dma.done %s164, 4096
        $region36: #{tpu_custom_call.1} parent=31 // pred_fallthru
          _
        %s173 = sand.u32 %s28, 1
        %s174 = scalar_lea.sflag [#allocation3], %s173
        %s175 = sand.u32 %s28, 1
        %s176 = smul.addr %s175, 256
        %s177 = scalar_lea.vmem [#allocation2], %s176
        %p178 = pneg %p41
        %p179 = pneg %p38
        %p180 = pneg %p62
        %p181 = pneg %p59
        %p182 = pneg %p83
        %p183 = pneg %p80
        %p184 = pneg %p109
        %p185 = pneg %p106
        %s186 = sand.u32 %s96, 1
        %s187 = scalar_lea.sflag [#allocation4], %s186
        %s188 = sand.u32 %s96, 1
        %s189 = smul.addr %s188, 256
        %s190 = scalar_lea.vmem [#allocation5], %s189
        %v191 = vld [vmem:[%s167] sm:$0xff]
        %v192 = vld [vmem:[%s167 + $0x8] sm:$0xff]
        %v193 = vld [vmem:[%s167 + $0x10] sm:$0xff]
        %v194 = vld [vmem:[%s167 + $0x18] sm:$0xff]
        %v195 = vld [vmem:[%s167 + $0x20] sm:$0xff]
        %v196 = vld [vmem:[%s167 + $0x28] sm:$0xff]
        %v197 = vld [vmem:[%s167 + $0x30] sm:$0xff]
        %v198 = vld [vmem:[%s167 + $0x38] sm:$0xff]
        %v199 = vld [vmem:[%s167 + $0x40] sm:$0xff]
        %v200 = vld [vmem:[%s167 + $0x48] sm:$0xff]
        %v201 = vld [vmem:[%s167 + $0x50] sm:$0xff]
        %v202 = vld [vmem:[%s167 + $0x58] sm:$0xff]
        %v203 = vld [vmem:[%s167 + $0x60] sm:$0xff]
        %v204 = vld [vmem:[%s167 + $0x68] sm:$0xff]
        %v205 = vld [vmem:[%s167 + $0x70] sm:$0xff]
        %v206 = vld [vmem:[%s167 + $0x78] sm:$0xff]
        %v207 = vld [vmem:[%s167 + $0x80] sm:$0xff]
        %v208 = vld [vmem:[%s167 + $0x88] sm:$0xff]
        %v209 = vld [vmem:[%s167 + $0x90] sm:$0xff]
        %v210 = vld [vmem:[%s167 + $0x98] sm:$0xff]
        %v211 = vld [vmem:[%s167 + $0xa0] sm:$0xff]
        %v212 = vld [vmem:[%s167 + $0xa8] sm:$0xff]
        %v213 = vld [vmem:[%s167 + $0xb0] sm:$0xff]
        %v214 = vld [vmem:[%s167 + $0xb8] sm:$0xff]
        %v215 = vld [vmem:[%s167 + $0xc0] sm:$0xff]
        %v216 = vld [vmem:[%s167 + $0xc8] sm:$0xff]
        %v217 = vld [vmem:[%s167 + $0xd0] sm:$0xff]
        %v218 = vld [vmem:[%s167 + $0xd8] sm:$0xff]
        %v219 = vld [vmem:[%s167 + $0xe0] sm:$0xff]
        %v220 = vld [vmem:[%s167 + $0xe8] sm:$0xff]
        %v221 = vld [vmem:[%s167 + $0xf0] sm:$0xff]
        %v222 = vld [vmem:[%s167 + $0xf8] sm:$0xff]
        %v223 = vadd.f32 %v191, %v192
        %224 = vadd.xlane.f32.xlu0 %v223
        %v225 = vpop.xlane.xlu0 %224
        %v226 = vadd.f32 %v193, %v194
        %227 = vadd.xlane.f32.xlu0 %v226
        %v228 = vpop.xlane.xlu0 %227
        %v229 = vadd.f32 %v195, %v196
        %230 = vadd.xlane.f32.xlu0 %v229
        %v231 = vpop.xlane.xlu0 %230
        %v232 = vadd.f32 %v197, %v198
        %233 = vadd.xlane.f32.xlu0 %v232
        %v234 = vpop.xlane.xlu0 %233
        %v235 = vadd.f32 %v199, %v200
        %236 = vadd.xlane.f32.xlu0 %v235
        %v237 = vpop.xlane.xlu0 %236
        %v238 = vadd.f32 %v201, %v202
        %239 = vadd.xlane.f32.xlu0 %v238
        %v240 = vpop.xlane.xlu0 %239
        %v241 = vadd.f32 %v203, %v204
        %242 = vadd.xlane.f32.xlu0 %v241
        %v243 = vpop.xlane.xlu0 %242
        %v244 = vadd.f32 %v205, %v206
        %245 = vadd.xlane.f32.xlu0 %v244
        %v246 = vpop.xlane.xlu0 %245
        %v247 = vadd.f32 %v207, %v208
        %248 = vadd.xlane.f32.xlu0 %v247
        %v249 = vpop.xlane.xlu0 %248
        %v250 = vadd.f32 %v209, %v210
        %251 = vadd.xlane.f32.xlu0 %v250
        %v252 = vpop.xlane.xlu0 %251
        %v253 = vadd.f32 %v211, %v212
        %254 = vadd.xlane.f32.xlu0 %v253
        %v255 = vpop.xlane.xlu0 %254
        %v256 = vadd.f32 %v213, %v214
        %257 = vadd.xlane.f32.xlu0 %v256
        %v258 = vpop.xlane.xlu0 %257
        %v259 = vadd.f32 %v215, %v216
        %260 = vadd.xlane.f32.xlu0 %v259
        %v261 = vpop.xlane.xlu0 %260
        %v262 = vadd.f32 %v217, %v218
        %263 = vadd.xlane.f32.xlu0 %v262
        %v264 = vpop.xlane.xlu0 %263
        %v265 = vadd.f32 %v219, %v220
        %266 = vadd.xlane.f32.xlu0 %v265
        %v267 = vpop.xlane.xlu0 %266
        %v268 = vadd.f32 %v221, %v222
        %269 = vadd.xlane.f32.xlu0 %v268
        %v270 = vpop.xlane.xlu0 %269
        %v271 = vld [vmem:[%s1] sm:$0xff]
        %v272 = vld [vmem:[%s1 + $0x8] sm:$0xff]
        %v273 = vld [vmem:[%s1 + $0x10] sm:$0xff]
        %v274 = vld [vmem:[%s1 + $0x18] sm:$0xff]
        %v275 = vld [vmem:[%s1 + $0x20] sm:$0xff]
        %v276 = vld [vmem:[%s1 + $0x28] sm:$0xff]
        %v277 = vld [vmem:[%s1 + $0x30] sm:$0xff]
        %v278 = vld [vmem:[%s1 + $0x38] sm:$0xff]
        %v279 = vld [vmem:[%s1 + $0x40] sm:$0xff]
        %v280 = vld [vmem:[%s1 + $0x48] sm:$0xff]
        %v281 = vld [vmem:[%s1 + $0x50] sm:$0xff]
        %v282 = vld [vmem:[%s1 + $0x58] sm:$0xff]
        %v283 = vld [vmem:[%s1 + $0x60] sm:$0xff]
        %v284 = vld [vmem:[%s1 + $0x68] sm:$0xff]
        %v285 = vld [vmem:[%s1 + $0x70] sm:$0xff]
        %v286 = vld [vmem:[%s1 + $0x78] sm:$0xff]
        %v303 = vlaneseq
        %v304 = vand.u32 %v303, 127
        %v305 = vperm.slane %v225, %v304
        %v306 = vadd.s32 %v304, 4294967288
        %v307 = vperm.slane %v228, %v306
        %vm308 = vcmask 130112
        %v309 = vsel %vm308, %v307, %v305
        %v310 = vadd.s32 %v304, 4294967280
        %v311 = vperm.slane %v231, %v310
        %vm312 = vcmask 195712
        %v313 = vsel %vm312, %v311, %v309
        %v314 = vadd.s32 %v304, 4294967272
        %v315 = vperm.slane %v234, %v314
        %vm316 = vcmask 261312
        %v317 = vsel %vm316, %v315, %v313
        %v318 = vadd.s32 %v304, 4294967264
        %v319 = vperm.slane %v237, %v318
        %vm320 = vcmask 326912
        %v321 = vsel %vm320, %v319, %v317
        %v322 = vadd.s32 %v304, 4294967256
        %v323 = vperm.slane %v240, %v322
        %vm324 = vcmask 392512
        %v325 = vsel %vm324, %v323, %v321
        %v326 = vadd.s32 %v304, 4294967248
        %v327 = vperm.slane %v243, %v326
        %vm328 = vcmask 458112
        %v329 = vsel %vm328, %v327, %v325
        %v330 = vadd.s32 %v304, 4294967240
        %v331 = vperm.slane %v246, %v330
        %vm332 = vcmask 523712
        %v333 = vsel %vm332, %v331, %v329
        %v334 = vadd.s32 %v304, 4294967232
        %v335 = vperm.slane %v249, %v334
        %vm336 = vcmask 589312
        %v337 = vsel %vm336, %v335, %v333
        %v338 = vadd.s32 %v304, 4294967224
        %v339 = vperm.slane %v252, %v338
        %vm340 = vcmask 654912
        %v341 = vsel %vm340, %v339, %v337
        %v342 = vadd.s32 %v304, 4294967216
        %v343 = vperm.slane %v255, %v342
        %vm344 = vcmask 720512
        %v345 = vsel %vm344, %v343, %v341
        %v346 = vadd.s32 %v304, 4294967208
        %v347 = vperm.slane %v258, %v346
        %vm348 = vcmask 786112
        %v349 = vsel %vm348, %v347, %v345
        %v350 = vadd.s32 %v304, 4294967200
        %v351 = vperm.slane %v261, %v350
        %vm352 = vcmask 851712
        %v353 = vsel %vm352, %v351, %v349
        %v354 = vadd.s32 %v304, 4294967192
        %v355 = vperm.slane %v264, %v354
        %vm356 = vcmask 917312
        %v357 = vsel %vm356, %v355, %v353
        %v358 = vadd.s32 %v304, 4294967184
        %v359 = vperm.slane %v267, %v358
        %vm360 = vcmask 982912
        %v361 = vsel %vm360, %v359, %v357
        %v362 = vadd.s32 %v304, 4294967176
        %v363 = vperm.slane %v270, %v362
        %vm364 = vcmask 1048512
        %v365 = vsel %vm364, %v363, %v361
        %367 = vmatpush.msra.mxu0 %v286
        %368 = vmatpush.msra.mxu0 %v285
        %369 = vmatpush.msra.mxu0 %v284
        %370 = vmatpush.msra.mxu0 %v283
        %371 = vmatpush.msra.mxu0 %v282
        %372 = vmatpush.msra.mxu0 %v281
        %373 = vmatpush.msra.mxu0 %v280
        %374 = vmatpush.msra.mxu0 %v279
        %375 = vmatpush.msra.mxu0 %v278
        %376 = vmatpush.msra.mxu0 %v277
        %377 = vmatpush.msra.mxu0 %v276
        %378 = vmatpush.msra.mxu0 %v275
        %379 = vmatpush.msra.mxu0 %v274
        %380 = vmatpush.msra.mxu0 %v273
        %381 = vmatpush.msra.mxu0 %v272
        %382 = vmatpush.msra.mxu0 %v271
        %383 = vmatmul.f32.gmra.mxu0 %v365
        %v384 = vpop.f32.mrf.mxu0
        %v385 = vadd.f32 0.0, %v384
        %386 = vdwg.mxu0
        %v387 = vmax.f32 %v385, 0.0
        %v388 = vld [vmem:[%s2] sm:$0xff]
        %vm389 = vcmask 64512
        %v391 = vsel %vm389, %v387, 0
        %393 = vmatpush.msra.mxu0 0.0
        %394 = vmatpush.msra.mxu0 0.0
        %395 = vmatpush.msra.mxu0 0.0
        %396 = vmatpush.msra.mxu0 0.0
        %397 = vmatpush.msra.mxu0 0.0
        %398 = vmatpush.msra.mxu0 0.0
        %399 = vmatpush.msra.mxu0 0.0
        %400 = vmatpush.msra.mxu0 0.0
        %401 = vmatpush.msra.mxu0 0.0
        %402 = vmatpush.msra.mxu0 0.0
        %403 = vmatpush.msra.mxu0 0.0
        %404 = vmatpush.msra.mxu0 0.0
        %405 = vmatpush.msra.mxu0 0.0
        %406 = vmatpush.msra.mxu0 0.0
        %407 = vmatpush.msra.mxu0 0.0
        %408 = vmatpush.msra.mxu0 %v388
        %409 = vmatmul.f32.gmra.mxu0 %v391
        %v410 = vpop.f32.mrf.mxu0
        %v411 = vadd.f32 0.0, %v410
        %412 = vdwg.mxu0
        %v413 = vxor.u32 %v411, 2147483648
        %v414 = vmul.f32 %v413, 1.442695
        %v415 = vpow.pop %v414
        %v416 = vadd.f32 %v415, 1.0
        %v417 = vrcp.pop %v416
        %v418 = vmul.f32 %v416, %v417
        %v419 = vsub.f32 1.0, %v418
        %v420 = vmul.f32 %v417, %v419
        %v421 = vadd.f32 %v417, %v420
        %vm422 = vweird.f32 %v416
        %vm423 = vweird.f32 %v417
        %vm424 = vmor %vm422, %vm423
        %v425 = vsel %vm424, %v417, %v421
        %v426 = vand.u32 2147483647, %v416
        %vm427 = vcmp.eq.f32.partialorder %v426, 8.507059e+37
        %v428 = vand.u32 %v416, 2147483648
        %v429 = vor.u32 1.1754944e-38, %v428
        %v430 = vsel %vm427, %v429, %v425
        %v431 = vmul.f32 1.0, %v430
        %v432 = vperm.slane %v431, 0
        %v433 = vlaneseq
        %v434 = vshrl.u32 %v433, 7
        %436 = vset.pattern.permute.xlu0 %v434
        %437 = vperm.xlu0 %436, %v432
        %v438 = vpop.permute.xlu0 %437
        %v439 = vlaneseq
        %v440 = vshrl.u32 %v439, 7
        %v441 = vadd.s32 %v440, 8
        %442 = vset.pattern.permute.xlu0 %v441
        %443 = vperm.xlu0 %442, %v432
        %v444 = vpop.permute.xlu0 %443
        %v445 = vlaneseq
        %v446 = vshrl.u32 %v445, 7
        %v447 = vadd.s32 %v446, 16
        %448 = vset.pattern.permute.xlu0 %v447
        %449 = vperm.xlu0 %448, %v432
        %v450 = vpop.permute.xlu0 %449
        %v451 = vlaneseq
        %v452 = vshrl.u32 %v451, 7
        %v453 = vadd.s32 %v452, 24
        %454 = vset.pattern.permute.xlu0 %v453
        %455 = vperm.xlu0 %454, %v432
        %v456 = vpop.permute.xlu0 %455
        %v457 = vlaneseq
        %v458 = vshrl.u32 %v457, 7
        %v459 = vadd.s32 %v458, 32
        %460 = vset.pattern.permute.xlu0 %v459
        %461 = vperm.xlu0 %460, %v432
        %v462 = vpop.permute.xlu0 %461
        %v463 = vlaneseq
        %v464 = vshrl.u32 %v463, 7
        %v465 = vadd.s32 %v464, 40
        %466 = vset.pattern.permute.xlu0 %v465
        %467 = vperm.xlu0 %466, %v432
        %v468 = vpop.permute.xlu0 %467
        %v469 = vlaneseq
        %v470 = vshrl.u32 %v469, 7
        %v471 = vadd.s32 %v470, 48
        %472 = vset.pattern.permute.xlu0 %v471
        %473 = vperm.xlu0 %472, %v432
        %v474 = vpop.permute.xlu0 %473
        %v475 = vlaneseq
        %v476 = vshrl.u32 %v475, 7
        %v477 = vadd.s32 %v476, 56
        %478 = vset.pattern.permute.xlu0 %v477
        %479 = vperm.xlu0 %478, %v432
        %v480 = vpop.permute.xlu0 %479
        %v481 = vlaneseq
        %v482 = vshrl.u32 %v481, 7
        %v483 = vadd.s32 %v482, 64
        %484 = vset.pattern.permute.xlu0 %v483
        %485 = vperm.xlu0 %484, %v432
        %v486 = vpop.permute.xlu0 %485
        %v487 = vlaneseq
        %v488 = vshrl.u32 %v487, 7
        %v489 = vadd.s32 %v488, 72
        %490 = vset.pattern.permute.xlu0 %v489
        %491 = vperm.xlu0 %490, %v432
        %v492 = vpop.permute.xlu0 %491
        %v493 = vlaneseq
        %v494 = vshrl.u32 %v493, 7
        %v495 = vadd.s32 %v494, 80
        %496 = vset.pattern.permute.xlu0 %v495
        %497 = vperm.xlu0 %496, %v432
        %v498 = vpop.permute.xlu0 %497
        %v499 = vlaneseq
        %v500 = vshrl.u32 %v499, 7
        %v501 = vadd.s32 %v500, 88
        %502 = vset.pattern.permute.xlu0 %v501
        %503 = vperm.xlu0 %502, %v432
        %v504 = vpop.permute.xlu0 %503
        %v505 = vlaneseq
        %v506 = vshrl.u32 %v505, 7
        %v507 = vadd.s32 %v506, 96
        %508 = vset.pattern.permute.xlu0 %v507
        %509 = vperm.xlu0 %508, %v432
        %v510 = vpop.permute.xlu0 %509
        %v511 = vlaneseq
        %v512 = vshrl.u32 %v511, 7
        %v513 = vadd.s32 %v512, 104
        %514 = vset.pattern.permute.xlu0 %v513
        %515 = vperm.xlu0 %514, %v432
        %v516 = vpop.permute.xlu0 %515
        %v517 = vlaneseq
        %v518 = vshrl.u32 %v517, 7
        %v519 = vadd.s32 %v518, 112
        %520 = vset.pattern.permute.xlu0 %v519
        %521 = vperm.xlu0 %520, %v432
        %v522 = vpop.permute.xlu0 %521
        %v523 = vlaneseq
        %v524 = vshrl.u32 %v523, 7
        %v525 = vadd.s32 %v524, 120
        %526 = vset.pattern.permute.xlu0 %v525
        %527 = vperm.xlu0 %526, %v432
        %v528 = vpop.permute.xlu0 %527
        %v529 = vmul.f32 %v191, %v438
        %v530 = vmul.f32 %v192, %v438
        %v531 = vmul.f32 %v193, %v444
        %v532 = vmul.f32 %v194, %v444
        %v533 = vmul.f32 %v195, %v450
        %v534 = vmul.f32 %v196, %v450
        %v535 = vmul.f32 %v197, %v456
        %v536 = vmul.f32 %v198, %v456
        %v537 = vmul.f32 %v199, %v462
        %v538 = vmul.f32 %v200, %v462
        %v539 = vmul.f32 %v201, %v468
        %v540 = vmul.f32 %v202, %v468
        %v541 = vmul.f32 %v203, %v474
        %v542 = vmul.f32 %v204, %v474
        %v543 = vmul.f32 %v205, %v480
        %v544 = vmul.f32 %v206, %v480
        %v545 = vmul.f32 %v207, %v486
        %v546 = vmul.f32 %v208, %v486
        %v547 = vmul.f32 %v209, %v492
        %v548 = vmul.f32 %v210, %v492
        %v549 = vmul.f32 %v211, %v498
        %v550 = vmul.f32 %v212, %v498
        %v551 = vmul.f32 %v213, %v504
        %v552 = vmul.f32 %v214, %v504
        %v553 = vmul.f32 %v215, %v510
        %v554 = vmul.f32 %v216, %v510
        %v555 = vmul.f32 %v217, %v516
        %v556 = vmul.f32 %v218, %v516
        %v557 = vmul.f32 %v219, %v522
        %v558 = vmul.f32 %v220, %v522
        %v559 = vmul.f32 %v221, %v528
        %v560 = vmul.f32 %v222, %v528
        %561 = vst [vmem:[%s190] sm:$0xff] %v529
        %562 = vst [vmem:[%s190 + $0x8] sm:$0xff] %v530
        %563 = vst [vmem:[%s190 + $0x10] sm:$0xff] %v531
        %564 = vst [vmem:[%s190 + $0x18] sm:$0xff] %v532
        %565 = vst [vmem:[%s190 + $0x20] sm:$0xff] %v533
        %566 = vst [vmem:[%s190 + $0x28] sm:$0xff] %v534
        %567 = vst [vmem:[%s190 + $0x30] sm:$0xff] %v535
        %568 = vst [vmem:[%s190 + $0x38] sm:$0xff] %v536
        %569 = vst [vmem:[%s190 + $0x40] sm:$0xff] %v537
        %570 = vst [vmem:[%s190 + $0x48] sm:$0xff] %v538
        %571 = vst [vmem:[%s190 + $0x50] sm:$0xff] %v539
        %572 = vst [vmem:[%s190 + $0x58] sm:$0xff] %v540
        %573 = vst [vmem:[%s190 + $0x60] sm:$0xff] %v541
        %574 = vst [vmem:[%s190 + $0x68] sm:$0xff] %v542
        %575 = vst [vmem:[%s190 + $0x70] sm:$0xff] %v543
        %576 = vst [vmem:[%s190 + $0x78] sm:$0xff] %v544
        %577 = vst [vmem:[%s190 + $0x80] sm:$0xff] %v545
        %578 = vst [vmem:[%s190 + $0x88] sm:$0xff] %v546
        %579 = vst [vmem:[%s190 + $0x90] sm:$0xff] %v547
        %580 = vst [vmem:[%s190 + $0x98] sm:$0xff] %v548
        %581 = vst [vmem:[%s190 + $0xa0] sm:$0xff] %v549
        %582 = vst [vmem:[%s190 + $0xa8] sm:$0xff] %v550
        %583 = vst [vmem:[%s190 + $0xb0] sm:$0xff] %v551
        %584 = vst [vmem:[%s190 + $0xb8] sm:$0xff] %v552
        %585 = vst [vmem:[%s190 + $0xc0] sm:$0xff] %v553
        %586 = vst [vmem:[%s190 + $0xc8] sm:$0xff] %v554
        %587 = vst [vmem:[%s190 + $0xd0] sm:$0xff] %v555
        %588 = vst [vmem:[%s190 + $0xd8] sm:$0xff] %v556
        %589 = vst [vmem:[%s190 + $0xe0] sm:$0xff] %v557
        %590 = vst [vmem:[%s190 + $0xe8] sm:$0xff] %v558
        %591 = vst [vmem:[%s190 + $0xf0] sm:$0xff] %v559
        %592 = vst [vmem:[%s190 + $0xf8] sm:$0xff] %v560
        %s593 = sand.u32 %s96, 1
        %s594 = scalar_lea.sflag [#allocation4], %s593
        %s595 = sand.u32 %s96, 1
        %s596 = smul.addr %s595, 256
        %s597 = scalar_lea.vmem [#allocation5], %s596
        // Predicated region
        $region37: #{tpu_custom_call.1} parent=31 // pred_check
          %p598 = pneg %p106
        $region38: #{tpu_custom_call.1} parent=31 // pred_check_branch
          %600 = sbr.rel (%p598) target = $region40
        $region39: #{tpu_custom_call.1} parent=31 // pred_region
          %602 = vsyncadd %s594, 0
          %s603 = smul.addr %s20, 32
          %s604 = smul.addr %s603, 8
          %s605 = scalar_lea.hbm %s3, %s604
          %s606 = sshll.u32 %s597, 4
          %s607 = int_to_ptr.vmem [resolvable:$true] %s606
          %s608 = sshll.u32 %s605, 4
          %s609 = int_to_ptr.hbm [resolvable:$true] %s608
          %614 = dma.vmem_to_hbm [thread:$0]  %s607, 4096, %s609, %s594, 256, 256, 16
        $region40: #{tpu_custom_call.1} parent=31 // pred_fallthru
          _
      $region32: #{tpu_custom_call.1} parent=5 // pred_fallthru
        _
      %p615 = scmp.le.s32.totalorder 2, %s15
      // Predicated region
      $region41: #{tpu_custom_call.1} parent=5 // pred_check
        %p616 = pneg %p615
      $region42: #{tpu_custom_call.1} parent=5 // pred_check_branch
        %618 = sbr.rel (%p616) target = $region44
      $region43: #{tpu_custom_call.1} parent=5 // pred_region
        %s619 = ssub.s32 %s15, 2
        // Predicated region
        $region45: #{tpu_custom_call.1} parent=43 // pred_check
          %p620 = pneg %p112
        $region46: #{tpu_custom_call.1} parent=43 // pred_check_branch
          %622 = sbr.rel (%p620) target = $region48
        $region47: #{tpu_custom_call.1} parent=43 // pred_region
          %s623 = sand.u32 %s97, 1
          %s624 = scalar_lea.sflag [#allocation4], %s623
          %s625 = sand.u32 %s97, 1
          %s626 = smul.addr %s625, 256
          %s627 = scalar_lea.vmem [#allocation5], %s626
          %629 = dma.done %s624, 4096
        $region48: #{tpu_custom_call.1} parent=43 // pred_fallthru
          _
      $region44: #{tpu_custom_call.1} parent=5 // pred_fallthru
        _
    $region6: #{tpu_custom_call.1} parent=1 // loop_footer
      %s19 = sadd.s32 1, %s15
    $region7: #{tpu_custom_call.1} parent=1 // loop_footer_branch
      %14 = sbr.rel target = $region3
    $region8: #{tpu_custom_call.1} parent=1 // loop_exit
      _
    %630 = vsyncpa [#allocation3], 1
    %s631 = scalar_lea.sflag [#allocation3], 1
    %632 = vsyncpa %s631, 1
    %633 = vsyncpa [#allocation4], 1
    %s634 = scalar_lea.sflag [#allocation4], 1
    %635 = vsyncpa %s634, 1

</llo_original>
